<compile_context>
chip_gen: v6e
topology: v6e:2x2x1
jax: 0.10.0
libtpu: 0.0.40
codegen_flags: <defaults>
</compile_context>

<pallas_src>
import jax
import jax.numpy as jnp
from jax.experimental import pallas as pl
from jax.experimental.pallas import tpu as pltpu


def _round_up(a, b):
    return (a + b - 1) // b * b


def _mlp_kernel(x_ref, wt_ref, scale_ref, shift_ref, o_ref, acc_ref):
    k = pl.program_id(2)

    @pl.when(k == 0)
    def _():
        acc_ref[...] = jnp.zeros_like(acc_ref)

    # bf16 MXU feed, f32 accumulation.
    acc_ref[...] += jnp.dot(x_ref[...], wt_ref[...],
                            preferred_element_type=jnp.float32)

    @pl.when(k == pl.num_programs(2) - 1)
    def _():
        # Fused epilogue: folded Linear bias + eval-mode BatchNorm affine.
        # (1, tn) scale/shift broadcast against the (tm, tn) f32 accumulator.
        y = acc_ref[...] * scale_ref[...] + shift_ref[...]
        o_ref[...] = y.astype(o_ref.dtype)


def mlp_forward(x, w, b, gamma, beta, running_mean, running_var,
                eps=1e-5, *, tm=128, tn=256, tk=256):
    """Forward of MLP(inSize, outSize) with outBn=True, outAct=False, outDp=False.

    x: (..., inSize)   w: (outSize, inSize)   b/gamma/beta/mean/var: (outSize,)
    """
    # TODO(synk): training-mode BatchNorm (batch statistics) and Dropout are not
    # implemented; BN uses running stats (eval mode) and dropout is identity,
    # matching the module's default flags (outAct=False, outDp=False).
    in_size = w.shape[1]
    out_size = w.shape[0]
    lead_shape = x.shape[:-1]

    x2 = x.reshape(-1, in_size)
    M, K, N = x2.shape[0], in_size, out_size

    # Fold Linear bias + eval BatchNorm into per-feature scale / shift (f32).
    inv_std = 1.0 / jnp.sqrt(running_var.astype(jnp.float32) + eps)
    scale = gamma.astype(jnp.float32) * inv_std
    shift = (b.astype(jnp.float32) - running_mean.astype(jnp.float32)) * scale \
            + beta.astype(jnp.float32)

    # Lane-dense padding: rows to multiples of 8, feature dims to multiples of 128.
    Mp = _round_up(M, 8)
    Kp = _round_up(K, 128)
    Np = _round_up(N, 128)
    tm = min(tm, Mp)
    tk = min(tk, Kp)
    tn = min(tn, Np)
    Mp = _round_up(Mp, tm)
    Kp = _round_up(Kp, tk)
    Np = _round_up(Np, tn)

    # bf16 MXU inputs (halves HBM bytes on the dominant streams); W pre-transposed
    # in the wrapper so the kernel never transposes in VMEM.
    x_p = jnp.zeros((Mp, Kp), jnp.bfloat16).at[:M, :K].set(x2.astype(jnp.bfloat16))
    wt_p = jnp.zeros((Kp, Np), jnp.bfloat16).at[:K, :N].set(w.T.astype(jnp.bfloat16))
    scale_p = jnp.zeros((1, Np), jnp.float32).at[0, :N].set(scale)
    shift_p = jnp.zeros((1, Np), jnp.float32).at[0, :N].set(shift)

    grid = (Mp // tm, Np // tn, Kp // tk)

    out = pl.pallas_call(
        _mlp_kernel,
        out_shape=jax.ShapeDtypeStruct((Mp, Np), jnp.float32),
        grid_spec=pltpu.PrefetchScalarGridSpec(
            num_scalar_prefetch=0,
            grid=grid,
            in_specs=[
                pl.BlockSpec((tm, tk), lambda i, j, k: (i, k)),   # x tile
                pl.BlockSpec((tk, tn), lambda i, j, k: (k, j)),   # W^T tile
                pl.BlockSpec((1, tn), lambda i, j, k: (0, j)),    # scale (resident)
                pl.BlockSpec((1, tn), lambda i, j, k: (0, j)),    # shift (resident)
            ],
            out_specs=pl.BlockSpec((tm, tn), lambda i, j, k: (i, j)),
            scratch_shapes=[pltpu.VMEM((tm, tn), jnp.float32)],
        ),
        compiler_params=pltpu.CompilerParams(
            dimension_semantics=("parallel", "parallel", "arbitrary"),
        ),
    )(x_p, wt_p, scale_p, shift_p)

    return out[:M, :N].reshape(*lead_shape, N)


if __name__ == "__main__":
    key = jax.random.PRNGKey(0)
    k1, k2, k3, k4, k5, k6, k7 = jax.random.split(key, 7)

    # Small shapes consistent with the module: 3D input (B, L, inSize).
    B, L, in_size, out_size = 4, 16, 512, 256
    eps = 1e-5

    x = jax.random.normal(k1, (B, L, in_size), dtype=jnp.float32)
    w = jax.random.normal(k2, (out_size, in_size), dtype=jnp.float32) / jnp.sqrt(in_size)
    b = 0.1 * jax.random.normal(k3, (out_size,), dtype=jnp.float32)
    # BatchNorm1d parameters / running stats (eval mode), non-trivial values.
    gamma = 0.5 + jax.random.uniform(k4, (out_size,), dtype=jnp.float32)
    beta = 0.1 * jax.random.normal(k5, (out_size,), dtype=jnp.float32)
    running_mean = 0.1 * jax.random.normal(k6, (out_size,), dtype=jnp.float32)
    running_var = 0.5 + jax.random.uniform(k7, (out_size,), dtype=jnp.float32)

    out = mlp_forward(x, w, b, gamma, beta, running_mean, running_var, eps=eps)
    out = jax.block_until_ready(out)

    # Reference (same bf16-quantized inputs, f32 math).
    xb = x.astype(jnp.bfloat16).astype(jnp.float32)
    wb = w.astype(jnp.bfloat16).astype(jnp.float32)
    lin = xb.reshape(-1, in_size) @ wb.T + b
    ref = (lin - running_mean) / jnp.sqrt(running_var + eps) * gamma + beta
    ref = ref.reshape(B, L, out_size)

    assert out.shape == (B, L, out_size), out.shape
    assert jnp.allclose(out, ref, atol=1e-2, rtol=1e-2), \
        f"max abs err {jnp.max(jnp.abs(out - ref))}"

    print("KERNEL_OK")
</pallas_src>

<mosaic_0001>
module attributes {stable_mosaic.version = 11 : i64} {
  func.func @_mlp_kernel(%arg0: i32, %arg1: i32, %arg2: i32, %arg3: memref<64x256xbf16, #tpu.memory_space<vmem>>, %arg4: memref<256x256xbf16, #tpu.memory_space<vmem>>, %arg5: memref<1x256xf32, #tpu.memory_space<vmem>>, %arg6: memref<1x256xf32, #tpu.memory_space<vmem>>, %arg7: memref<64x256xf32, #tpu.memory_space<vmem>>, %arg8: memref<64x256xf32, #tpu.memory_space<vmem>>) attributes {dimension_semantics = [#tpu.dimension_semantics<parallel>, #tpu.dimension_semantics<parallel>, #tpu.dimension_semantics<arbitrary>], iteration_bounds = array<i64: 1, 1, 2>, scalar_prefetch = 0 : i64, scratch_operands = 1 : i64, tpu.core_type = #tpu.core_type<tc>, window_params = [{transform_indices = @transform_0, window_bounds = array<i64: 64, 256>}, {transform_indices = @transform_1, window_bounds = array<i64: 256, 256>}, {transform_indices = @transform_2, window_bounds = array<i64: 1, 256>}, {transform_indices = @transform_3, window_bounds = array<i64: 1, 256>}, {transform_indices = @transform_4, window_bounds = array<i64: 64, 256>}]} {
    %c0_i32 = arith.constant 0 : i32
    %0 = arith.cmpi eq, %arg2, %c0_i32 : i32
    %1 = arith.extui %0 : i1 to i32
    %c0_i32_0 = arith.constant 0 : i32
    %2 = arith.cmpi ne, %1, %c0_i32_0 : i32
    scf.if %2 {
      %cst_9 = arith.constant 0.000000e+00 : f32
      %12 = vector.broadcast %cst_9 : f32 to vector<64x256xf32>
      %c0_10 = arith.constant 0 : index
      %c0_11 = arith.constant 0 : index
      %13 = vector.load %arg8[%c0_10, %c0_11] : memref<64x256xf32, #tpu.memory_space<vmem>>, vector<64x256xf32>
      tpu.vector_store %arg8[%c0_10, %c0_11], %12 {strides = array<i32>} : memref<64x256xf32, #tpu.memory_space<vmem>>, vector<64x256xf32>,
    } else {
    }
    %c0 = arith.constant 0 : index
    %c0_1 = arith.constant 0 : index
    %3 = vector.load %arg8[%c0, %c0_1] : memref<64x256xf32, #tpu.memory_space<vmem>>, vector<64x256xf32>
    %c0_2 = arith.constant 0 : index
    %c0_3 = arith.constant 0 : index
    %4 = vector.load %arg3[%c0_2, %c0_3] : memref<64x256xbf16, #tpu.memory_space<vmem>>, vector<64x256xbf16>
    %c0_4 = arith.constant 0 : index
    %c0_5 = arith.constant 0 : index
    %5 = vector.load %arg4[%c0_4, %c0_5] : memref<256x256xbf16, #tpu.memory_space<vmem>>, vector<256x256xbf16>
    %cst = arith.constant dense<0.000000e+00> : vector<64x256xf32>
    %6 = tpu.matmul %4, %5, %cst {dimension_numbers = #tpu.dot_dimension_numbers<[1], [0], [0], [1], [0, 0, 1, 1], [], []>} : vector<64x256xbf16>, vector<256x256xbf16>, vector<64x256xf32> -> vector<64x256xf32>
    %7 = arith.addf %3, %6 : vector<64x256xf32>
    %c0_6 = arith.constant 0 : index
    %c0_7 = arith.constant 0 : index
    %8 = vector.load %arg8[%c0_6, %c0_7] : memref<64x256xf32, #tpu.memory_space<vmem>>, vector<64x256xf32>
    tpu.vector_store %arg8[%c0_6, %c0_7], %7 {strides = array<i32>} : memref<64x256xf32, #tpu.memory_space<vmem>>, vector<64x256xf32>,
    %c1_i32 = arith.constant 1 : i32
    %9 = arith.cmpi eq, %arg2, %c1_i32 : i32
    %10 = arith.extui %9 : i1 to i32
    %c0_i32_8 = arith.constant 0 : i32
    %11 = arith.cmpi ne, %10, %c0_i32_8 : i32
    scf.if %11 {
      %c0_9 = arith.constant 0 : index
      %c0_10 = arith.constant 0 : index
      %12 = vector.load %arg8[%c0_9, %c0_10] : memref<64x256xf32, #tpu.memory_space<vmem>>, vector<64x256xf32>
      %c0_11 = arith.constant 0 : index
      %c0_12 = arith.constant 0 : index
      %13 = vector.load %arg5[%c0_11, %c0_12] : memref<1x256xf32, #tpu.memory_space<vmem>>, vector<1x256xf32>
      %14 = vector.broadcast %13 : vector<1x256xf32> to vector<64x256xf32>
      %15 = arith.mulf %12, %14 : vector<64x256xf32>
      %c0_13 = arith.constant 0 : index
      %c0_14 = arith.constant 0 : index
      %16 = vector.load %arg6[%c0_13, %c0_14] : memref<1x256xf32, #tpu.memory_space<vmem>>, vector<1x256xf32>
      %17 = vector.broadcast %16 : vector<1x256xf32> to vector<64x256xf32>
      %18 = arith.addf %15, %17 : vector<64x256xf32>
      %c0_15 = arith.constant 0 : index
      %c0_16 = arith.constant 0 : index
      %19 = vector.load %arg7[%c0_15, %c0_16] : memref<64x256xf32, #tpu.memory_space<vmem>>, vector<64x256xf32>
      tpu.vector_store %arg7[%c0_15, %c0_16], %18 {strides = array<i32>} : memref<64x256xf32, #tpu.memory_space<vmem>>, vector<64x256xf32>,
    } else {
    }
    return
  }
  func.func @transform_0(%arg0: i32, %arg1: i32, %arg2: i32) -> (i32, i32) {
    %c0_i32 = arith.constant 0 : i32
    return %arg0, %arg2 : i32, i32
  }
  func.func @transform_1(%arg0: i32, %arg1: i32, %arg2: i32) -> (i32, i32) {
    %c0_i32 = arith.constant 0 : i32
    return %arg2, %arg1 : i32, i32
  }
  func.func @transform_2(%arg0: i32, %arg1: i32, %arg2: i32) -> (i32, i32) {
    %c0_i32 = arith.constant 0 : i32
    %c0_i32_0 = arith.constant 0 : i32
    return %c0_i32, %arg1 : i32, i32
  }
  func.func @transform_3(%arg0: i32, %arg1: i32, %arg2: i32) -> (i32, i32) {
    %c0_i32 = arith.constant 0 : i32
    %c0_i32_0 = arith.constant 0 : i32
    return %c0_i32, %arg1 : i32, i32
  }
  func.func @transform_4(%arg0: i32, %arg1: i32, %arg2: i32) -> (i32, i32) {
    %c0_i32 = arith.constant 0 : i32
    return %arg0, %arg1 : i32, i32
  }
}

</mosaic_0001>

<llo_original>
// kernel: tpu_custom_call.1
$region0: #{tpu_custom_call.1}
  #allocation0 [shape = 'u32[]', space=smem, size = 0x4, offset = 0x4, fixed_abs, tag = 'smem constant byte address 0x4 - core index']
  #allocation1 [shape = 'u32[144,128]{1,0:T(1,128)}', space=vmem, size = 0x12000, scoped, tag = 'internal scratch']
  #allocation2 [shape = 'f32[64,256]{1,0:T(8,128)}', space=vmem, size = 0x10000, scoped, tag = 'scratch operand']
  %s0 = inlined_call_operand.hbm [shape: bf16[64,512], index: 0, kind: input, shape index: {}]
  %s1 = inlined_call_operand.hbm [shape: bf16[512,256], index: 1, kind: input, shape index: {}]
  %s2 = inlined_call_operand.vmem [shape: f32[1,256], index: 2, kind: input, shape index: {}]
  %s3 = inlined_call_operand.vmem [shape: f32[1,256], index: 3, kind: input, shape index: {}]
  %s4 = inlined_call_operand.hbm [shape: f32[64,256], index: 4, kind: output, shape index: {}]
  %s5 = sld [smem:[#allocation0]]
  $region65: #{tpu_custom_call.1} parent=0
    _
  %s7 = ssub.s32 1, %s5
  %s8 = scalar_select 0, %s7, %s5
  $region1: #{tpu_custom_call.1} parent=0
    #allocation3 [shape = 'u8[65536]{0}', space=vmem, size = 0x10000, scoped, tag = 'input window, operand 0']
    #allocation4 [shape = 's32[2]{0}', space=sflag, size = 0x8, scoped, tag = 'scoped memory for tpu_custom_call.1']
    #allocation5 [shape = 's32[2]{0}', space=sflag, size = 0x8, scoped, tag = 'scoped memory for tpu_custom_call.1']
    #allocation6 [shape = 'u8[262144]{0}', space=vmem, size = 0x40000, scoped, tag = 'input window, operand 1']
    #allocation7 [shape = 's32[2]{0}', space=sflag, size = 0x8, scoped, tag = 'scoped memory for tpu_custom_call.1']
    #allocation8 [shape = 'u8[65536]{0}', space=vmem, size = 0x10000, scoped, tag = 'output window, operand 0, single buffered']
    %9 = vsyncpa [#allocation4], 0
    %s10 = scalar_lea.sflag [#allocation4], 1
    %11 = vsyncpa %s10, 0
    %12 = vsyncpa [#allocation7], 0
    %s13 = scalar_lea.sflag [#allocation7], 1
    %14 = vsyncpa %s13, 0
    %15 = vsyncpa [#allocation5], 0
    loop: start=0, step=1, limit=4
    $region2: #{tpu_custom_call.1} parent=1 // loop_pre_header
      _
    $region3: #{tpu_custom_call.1} parent=1 // loop_header
      %s17 = sphi 0, %s21
      %p18 = scmp.ge.s32.totalorder %s17, 4
      %s24 = sphi 0, %s43
      %s25 = sphi 0, %s39
      %s26 = sphi 0, %s35
      %s27 = sphi 0, %s24
      %s28 = sphi 0, %s25
      %s29 = sphi 0, %s26
      %s30 = sphi 0, %s27
      %s31 = sphi 0, %s28
      %s32 = sphi 0, %s29
      %s48 = sphi 0, %s50
      %s51 = sphi 0, %s48
      %s52 = sphi 0, %s51
      %s68 = sphi 0, %s52
      %s76 = sphi 0, %s78
      %s79 = sphi 0, %s76
      %s80 = sphi 0, %s79
      %s96 = sphi 0, %s80
      %s102 = sphi 0, %s104
      %s105 = sphi 0, %s102
      %s106 = sphi 0, %s105
      %s122 = sphi 0, %s106
      %s128 = sphi 0, %s130
      %s131 = sphi 0, %s128
      %s132 = sphi 0, %s131
      %s148 = sphi 0, %s132
      %s156 = sphi 0, %s158
      %s159 = sphi 0, %s156
      %s160 = sphi 0, %s159
      %s176 = sphi 0, %s160
    $region4: #{tpu_custom_call.1} parent=1 // loop_header_branch
      %20 = sbr.rel (%p18) target = $region8
    $region5: #{tpu_custom_call.1} parent=1 // loop_body
      %s22 = ssub.s32 %s17, 1
      %s23 = ssub.s32 %s17, 2
      %s33 = sadd.s32 1, %s26
      %p34 = scmp.ge.s32.totalorder %s33, 2
      %s35 = scalar_select %p34, 0, %s33
      %s36 = sadd.s32 1, %s25
      %s37 = scalar_select %p34, %s36, %s25
      %p38 = scmp.ge.s32.totalorder %s37, 1
      %s39 = scalar_select %p38, 0, %s37
      %s40 = sadd.s32 1, %s24
      %s41 = scalar_select %p38, %s40, %s24
      %p42 = scmp.ge.s32.totalorder %s41, 1
      %s43 = scalar_select %p42, 0, %s41
      %s44 = ssub.s32 %s24, %s43
      %s45 = ssub.s32 %s26, %s35
      %s46 = sor.u32 %s44, %s45
      %p47 = scmp.eq.s32.totalorder %s46, 0
      %s49 = sadd.s32 %s48, 1
      %s50 = scalar_select %p47, %s48, %s49
      %p53 = pneg %p47
      %p54 = scmp.eq.s32.totalorder %s17, 1
      %p55 = por %p53, %p54
      %p56 = scmp.ne.s32.totalorder %s48, %s51
      %p57 = scmp.eq.s32.totalorder %s17, 0
      %p58 = por %p56, %p57
      %p59 = scmp.ne.s32.totalorder %s48, %s51
      %p60 = scmp.eq.s32.totalorder %s22, 1
      %p61 = por %p59, %p60
      %p62 = scmp.ne.s32.totalorder %s51, %s52
      %p63 = scmp.eq.s32.totalorder %s22, 0
      %p64 = por %p62, %p63
      %p65 = scmp.ne.s32.totalorder %s51, %s52
      %p66 = scmp.eq.s32.totalorder %s23, 1
      %p67 = por %p65, %p66
      %p69 = scmp.ne.s32.totalorder %s52, %s68
      %p70 = scmp.eq.s32.totalorder %s23, 0
      %p71 = por %p69, %p70
      %s72 = ssub.s32 %s26, %s35
      %s73 = ssub.s32 %s25, %s39
      %s74 = sor.u32 %s72, %s73
      %p75 = scmp.eq.s32.totalorder %s74, 0
      %s77 = sadd.s32 %s76, 1
      %s78 = scalar_select %p75, %s76, %s77
      %p81 = pneg %p75
      %p82 = scmp.eq.s32.totalorder %s17, 1
      %p83 = por %p81, %p82
      %p84 = scmp.ne.s32.totalorder %s76, %s79
      %p85 = scmp.eq.s32.totalorder %s17, 0
      %p86 = por %p84, %p85
      %p87 = scmp.ne.s32.totalorder %s76, %s79
      %p88 = scmp.eq.s32.totalorder %s22, 1
      %p89 = por %p87, %p88
      %p90 = scmp.ne.s32.totalorder %s79, %s80
      %p91 = scmp.eq.s32.totalorder %s22, 0
      %p92 = por %p90, %p91
      %p93 = scmp.ne.s32.totalorder %s79, %s80
      %p94 = scmp.eq.s32.totalorder %s23, 1
      %p95 = por %p93, %p94
      %p97 = scmp.ne.s32.totalorder %s80, %s96
      %p98 = scmp.eq.s32.totalorder %s23, 0
      %p99 = por %p97, %p98
      %s100 = ssub.s32 %s25, %s39
      %p101 = scmp.eq.s32.totalorder %s100, 0
      %s103 = sadd.s32 %s102, 1
      %s104 = scalar_select %p101, %s102, %s103
      %p107 = pneg %p101
      %p108 = scmp.eq.s32.totalorder %s17, 1
      %p109 = por %p107, %p108
      %p110 = scmp.ne.s32.totalorder %s102, %s105
      %p111 = scmp.eq.s32.totalorder %s17, 0
      %p112 = por %p110, %p111
      %p113 = scmp.ne.s32.totalorder %s102, %s105
      %p114 = scmp.eq.s32.totalorder %s22, 1
      %p115 = por %p113, %p114
      %p116 = scmp.ne.s32.totalorder %s105, %s106
      %p117 = scmp.eq.s32.totalorder %s22, 0
      %p118 = por %p116, %p117
      %p119 = scmp.ne.s32.totalorder %s105, %s106
      %p120 = scmp.eq.s32.totalorder %s23, 1
      %p121 = por %p119, %p120
      %p123 = scmp.ne.s32.totalorder %s106, %s122
      %p124 = scmp.eq.s32.totalorder %s23, 0
      %p125 = por %p123, %p124
      %s126 = ssub.s32 %s25, %s39
      %p127 = scmp.eq.s32.totalorder %s126, 0
      %s129 = sadd.s32 %s128, 1
      %s130 = scalar_select %p127, %s128, %s129
      %p133 = pneg %p127
      %p134 = scmp.eq.s32.totalorder %s17, 1
      %p135 = por %p133, %p134
      %p136 = scmp.ne.s32.totalorder %s128, %s131
      %p137 = scmp.eq.s32.totalorder %s17, 0
      %p138 = por %p136, %p137
      %p139 = scmp.ne.s32.totalorder %s128, %s131
      %p140 = scmp.eq.s32.totalorder %s22, 1
      %p141 = por %p139, %p140
      %p142 = scmp.ne.s32.totalorder %s131, %s132
      %p143 = scmp.eq.s32.totalorder %s22, 0
      %p144 = por %p142, %p143
      %p145 = scmp.ne.s32.totalorder %s131, %s132
      %p146 = scmp.eq.s32.totalorder %s23, 1
      %p147 = por %p145, %p146
      %p149 = scmp.ne.s32.totalorder %s132, %s148
      %p150 = scmp.eq.s32.totalorder %s23, 0
      %p151 = por %p149, %p150
      %s152 = ssub.s32 %s24, %s43
      %s153 = ssub.s32 %s25, %s39
      %s154 = sor.u32 %s152, %s153
      %p155 = scmp.eq.s32.totalorder %s154, 0
      %s157 = sadd.s32 %s156, 1
      %s158 = scalar_select %p155, %s156, %s157
      %p161 = pneg %p155
      %p162 = scmp.eq.s32.totalorder %s17, 1
      %p163 = por %p161, %p162
      %p164 = scmp.ne.s32.totalorder %s156, %s159
      %p165 = scmp.eq.s32.totalorder %s17, 0
      %p166 = por %p164, %p165
      %p167 = scmp.ne.s32.totalorder %s156, %s159
      %p168 = scmp.eq.s32.totalorder %s22, 1
      %p169 = por %p167, %p168
      %p170 = scmp.ne.s32.totalorder %s159, %s160
      %p171 = scmp.eq.s32.totalorder %s22, 0
      %p172 = por %p170, %p171
      %p173 = scmp.ne.s32.totalorder %s159, %s160
      %p174 = scmp.eq.s32.totalorder %s23, 1
      %p175 = por %p173, %p174
      %p177 = scmp.ne.s32.totalorder %s160, %s176
      %p178 = scmp.eq.s32.totalorder %s23, 0
      %p179 = por %p177, %p178
      %p180 = scmp.le.s32.totalorder 1, %s17
      %p181 = scmp.lt.s32.totalorder %s17, 3
      %p182 = pnand %p180, %p181
      %p183 = pneg %p182
      // Predicated region
      $region9: #{tpu_custom_call.1} parent=5 // pred_check
        _
      $region10: #{tpu_custom_call.1} parent=5 // pred_check_branch
        %185 = sbr.rel (%p182) target = $region12
      $region11: #{tpu_custom_call.1} parent=5 // pred_region
        %s186 = ssub.s32 %s17, 1
        // Predicated region
        $region13: #{tpu_custom_call.1} parent=11 // pred_check
          %p187 = pneg %p118
        $region14: #{tpu_custom_call.1} parent=11 // pred_check_branch
          %189 = sbr.rel (%p187) target = $region16
        $region15: #{tpu_custom_call.1} parent=11 // pred_region
          %s190 = smul.u32 2, %s28
          %p191 = scmp.lt.s32.totalorder %s190, 1
          %s192 = scalar_select %p191, %s190, 1
          %s193 = scalar_lea.vmem %s2, %s192
          %s194 = smul.u32 2, %s28
        $region16: #{tpu_custom_call.1} parent=11 // pred_fallthru
          _
        // Predicated region
        $region17: #{tpu_custom_call.1} parent=11 // pred_check
          %p195 = pneg %p144
        $region18: #{tpu_custom_call.1} parent=11 // pred_check_branch
          %197 = sbr.rel (%p195) target = $region20
        $region19: #{tpu_custom_call.1} parent=11 // pred_region
          %s198 = smul.u32 2, %s28
          %p199 = scmp.lt.s32.totalorder %s198, 1
          %s200 = scalar_select %p199, %s198, 1
          %s201 = scalar_lea.vmem %s3, %s200
          %s202 = smul.u32 2, %s28
        $region20: #{tpu_custom_call.1} parent=11 // pred_fallthru
          _
      $region12: #{tpu_custom_call.1} parent=5 // pred_fallthru
        _
      %p203 = scmp.lt.s32.totalorder %s17, 2
      // Predicated region
      $region21: #{tpu_custom_call.1} parent=5 // pred_check
        %p204 = pneg %p203
      $region22: #{tpu_custom_call.1} parent=5 // pred_check_branch
        %206 = sbr.rel (%p204) target = $region24
      $region23: #{tpu_custom_call.1} parent=5 // pred_region
        // Predicated region
        $region25: #{tpu_custom_call.1} parent=23 // pred_check
          %p207 = pneg %p58
        $region26: #{tpu_custom_call.1} parent=23 // pred_check_branch
          %209 = sbr.rel (%p207) target = $region28
        $region27: #{tpu_custom_call.1} parent=23 // pred_region
          %s210 = sand.u32 %s48, 1
          %s211 = scalar_lea.sflag [#allocation4], %s210
          %s212 = sand.u32 %s48, 1
          %s213 = smul.addr %s212, 64
          %s214 = scalar_lea.vmem [#allocation3], %s213
          %s215 = smul.u32 8, %s24
          %s216 = smul.u32 2, %s26
          %s218 = ssub.s32 1024, 1024
          %219 = vsyncadd %s211, %s218
          %s220 = smul.addr %s215, 4
          %s221 = sadd.s32 %s216, %s220
          %s222 = smul.addr %s221, 64
          %s223 = scalar_lea.hbm %s0, %s222
          %s224 = sshll.u32 %s214, 4
          %s225 = int_to_ptr.vmem [resolvable:$true] %s224
          %230 = dma.hbm_to_vmem [thread:$0]  %s223, 1024, %s225, %s211, 256, 128, 8
        $region28: #{tpu_custom_call.1} parent=23 // pred_fallthru
          _
        // Predicated region
        $region29: #{tpu_custom_call.1} parent=23 // pred_check
          %p231 = pneg %p86
        $region30: #{tpu_custom_call.1} parent=23 // pred_check_branch
          %233 = sbr.rel (%p231) target = $region32
        $region31: #{tpu_custom_call.1} parent=23 // pred_region
          %s234 = sand.u32 %s76, 1
          %s235 = scalar_lea.sflag [#allocation7], %s234
          %s236 = sand.u32 %s76, 1
          %s237 = smul.addr %s236, 256
          %s238 = scalar_lea.vmem [#allocation6], %s237
          %s239 = smul.u32 32, %s26
          %s240 = smul.u32 2, %s25
          %s242 = ssub.s32 4096, 4096
          %243 = vsyncadd %s235, %s242
          %s244 = smul.addr %s239, 2
          %s245 = sadd.s32 %s240, %s244
          %s246 = smul.addr %s245, 64
          %s247 = scalar_lea.hbm %s1, %s246
          %s248 = sshll.u32 %s238, 4
          %s249 = int_to_ptr.vmem [resolvable:$true] %s248
          %254 = dma.hbm_to_vmem [thread:$0]  %s247, 4096, %s249, %s235, 128, 128, 8
        $region32: #{tpu_custom_call.1} parent=23 // pred_fallthru
          _
      $region24: #{tpu_custom_call.1} parent=5 // pred_fallthru
        _
      %p255 = scmp.le.s32.totalorder 1, %s17
      %p256 = scmp.lt.s32.totalorder %s17, 3
      %p257 = pnand %p255, %p256
      %p258 = pneg %p257
      // Predicated region
      $region33: #{tpu_custom_call.1} parent=5 // pred_check
        _
      $region34: #{tpu_custom_call.1} parent=5 // pred_check_branch
        %260 = sbr.rel (%p257) target = $region36
      $region35: #{tpu_custom_call.1} parent=5 // pred_region
        %s261 = ssub.s32 %s17, 1
        %s262 = sand.u32 %s51, 1
        %s263 = scalar_lea.sflag [#allocation4], %s262
        %s264 = sand.u32 %s51, 1
        %s265 = smul.addr %s264, 64
        %s266 = scalar_lea.vmem [#allocation3], %s265
        // Predicated region
        $region37: #{tpu_custom_call.1} parent=35 // pred_check
          %p267 = pneg %p64
        $region38: #{tpu_custom_call.1} parent=35 // pred_check_branch
          %269 = sbr.rel (%p267) target = $region40
        $region39: #{tpu_custom_call.1} parent=35 // pred_region
          %270 = dma.done %s263, 1024
        $region40: #{tpu_custom_call.1} parent=35 // pred_fallthru
          _
        %s271 = sand.u32 %s79, 1
        %s272 = scalar_lea.sflag [#allocation7], %s271
        %s273 = sand.u32 %s79, 1
        %s274 = smul.addr %s273, 256
        %s275 = scalar_lea.vmem [#allocation6], %s274
        // Predicated region
        $region41: #{tpu_custom_call.1} parent=35 // pred_check
          %p276 = pneg %p92
        $region42: #{tpu_custom_call.1} parent=35 // pred_check_branch
          %278 = sbr.rel (%p276) target = $region44
        $region43: #{tpu_custom_call.1} parent=35 // pred_region
          %279 = dma.done %s272, 4096
        $region44: #{tpu_custom_call.1} parent=35 // pred_fallthru
          _
        %s280 = sand.u32 %s51, 1
        %s281 = scalar_lea.sflag [#allocation4], %s280
        %s282 = sand.u32 %s51, 1
        %s283 = smul.addr %s282, 64
        %s284 = scalar_lea.vmem [#allocation3], %s283
        %p285 = pneg %p64
        %p286 = pneg %p61
        %s287 = sand.u32 %s79, 1
        %s288 = scalar_lea.sflag [#allocation7], %s287
        %s289 = sand.u32 %s79, 1
        %s290 = smul.addr %s289, 256
        %s291 = scalar_lea.vmem [#allocation6], %s290
        %p292 = pneg %p92
        %p293 = pneg %p89
        %s294 = smul.u32 2, %s28
        %p295 = scmp.lt.s32.totalorder %s294, 1
        %s296 = scalar_select %p295, %s294, 1
        %s297 = scalar_lea.vmem %s2, %s296
        %p298 = pneg %p118
        %p299 = pneg %p115
        %s300 = smul.u32 2, %s28
        %p301 = scmp.lt.s32.totalorder %s300, 1
        %s302 = scalar_select %p301, %s300, 1
        %s303 = scalar_lea.vmem %s3, %s302
        %p304 = pneg %p144
        %p305 = pneg %p141
        %p306 = pneg %p172
        %p307 = pneg %p169
        %s308 = smul.u32 8, %s27
        %s309 = smul.u32 2, %s29
        %s310 = smul.u32 32, %s29
        %s311 = smul.u32 2, %s28
        %s312 = smul.u32 2, %s28
        %p313 = scmp.lt.s32.totalorder %s312, 1
        %s314 = scalar_select %p313, %s312, 1
        %s315 = scalar_lea.vmem %s2, %s314
        %s316 = smul.u32 2, %s28
        %s317 = smul.u32 2, %s28
        %p318 = scmp.lt.s32.totalorder %s317, 1
        %s319 = scalar_select %p318, %s317, 1
        %s320 = scalar_lea.vmem %s3, %s319
        %s321 = smul.u32 2, %s28
        %s322 = smul.u32 8, %s27
        %s323 = smul.u32 2, %s28
        %p324 = scmp.eq.s32.totalorder %s29, 0
        // Predicated region
        $region45: #{tpu_custom_call.1} parent=35 // pred_check
          %p325 = pneg %p324
        $region46: #{tpu_custom_call.1} parent=35 // pred_check_branch
          %327 = sbr.rel (%p325) target = $region48
        $region47: #{tpu_custom_call.1} parent=35 // pred_region
          %328 = vst [vmem:[#allocation2] sm:$0xff] 0.0
          %329 = vst [vmem:[#allocation2 + $0x8] sm:$0xff] 0.0
          %330 = vst [vmem:[#allocation2 + $0x10] sm:$0xff] 0.0
          %331 = vst [vmem:[#allocation2 + $0x18] sm:$0xff] 0.0
          %332 = vst [vmem:[#allocation2 + $0x20] sm:$0xff] 0.0
          %333 = vst [vmem:[#allocation2 + $0x28] sm:$0xff] 0.0
          %334 = vst [vmem:[#allocation2 + $0x30] sm:$0xff] 0.0
          %335 = vst [vmem:[#allocation2 + $0x38] sm:$0xff] 0.0
          %336 = vst [vmem:[#allocation2 + $0x40] sm:$0xff] 0.0
          %337 = vst [vmem:[#allocation2 + $0x48] sm:$0xff] 0.0
          %338 = vst [vmem:[#allocation2 + $0x50] sm:$0xff] 0.0
          %339 = vst [vmem:[#allocation2 + $0x58] sm:$0xff] 0.0
          %340 = vst [vmem:[#allocation2 + $0x60] sm:$0xff] 0.0
          %341 = vst [vmem:[#allocation2 + $0x68] sm:$0xff] 0.0
          %342 = vst [vmem:[#allocation2 + $0x70] sm:$0xff] 0.0
          %343 = vst [vmem:[#allocation2 + $0x78] sm:$0xff] 0.0
        $region48: #{tpu_custom_call.1} parent=35 // pred_fallthru
          _
        %v344 = vld [vmem:[#allocation2] sm:$0xff]
        %v345 = vld [vmem:[#allocation2 + $0x8] sm:$0xff]
        %v346 = vld [vmem:[#allocation2 + $0x10] sm:$0xff]
        %v347 = vld [vmem:[#allocation2 + $0x18] sm:$0xff]
        %v348 = vld [vmem:[#allocation2 + $0x20] sm:$0xff]
        %v349 = vld [vmem:[#allocation2 + $0x28] sm:$0xff]
        %v350 = vld [vmem:[#allocation2 + $0x30] sm:$0xff]
        %v351 = vld [vmem:[#allocation2 + $0x38] sm:$0xff]
        %v352 = vld [vmem:[#allocation2 + $0x40] sm:$0xff]
        %v353 = vld [vmem:[#allocation2 + $0x48] sm:$0xff]
        %v354 = vld [vmem:[#allocation2 + $0x50] sm:$0xff]
        %v355 = vld [vmem:[#allocation2 + $0x58] sm:$0xff]
        %v356 = vld [vmem:[#allocation2 + $0x60] sm:$0xff]
        %v357 = vld [vmem:[#allocation2 + $0x68] sm:$0xff]
        %v358 = vld [vmem:[#allocation2 + $0x70] sm:$0xff]
        %v359 = vld [vmem:[#allocation2 + $0x78] sm:$0xff]
        %v360 = vld [vmem:[%s266] sm:$0xff]
        %v361 = vld [vmem:[%s266 + $0x8] sm:$0xff]
        %v362 = vld [vmem:[%s266 + $0x10] sm:$0xff]
        %v363 = vld [vmem:[%s266 + $0x18] sm:$0xff]
        %v364 = vld [vmem:[%s266 + $0x20] sm:$0xff]
        %v365 = vld [vmem:[%s266 + $0x28] sm:$0xff]
        %v366 = vld [vmem:[%s266 + $0x30] sm:$0xff]
        %v367 = vld [vmem:[%s266 + $0x38] sm:$0xff]
        %v368 = vld [vmem:[%s275] sm:$0xff]
        %v369 = vld [vmem:[%s275 + $0x8] sm:$0xff]
        %v370 = vld [vmem:[%s275 + $0x10] sm:$0xff]
        %v371 = vld [vmem:[%s275 + $0x18] sm:$0xff]
        %v372 = vld [vmem:[%s275 + $0x20] sm:$0xff]
        %v373 = vld [vmem:[%s275 + $0x28] sm:$0xff]
        %v374 = vld [vmem:[%s275 + $0x30] sm:$0xff]
        %v375 = vld [vmem:[%s275 + $0x38] sm:$0xff]
        %v376 = vld [vmem:[%s275 + $0x40] sm:$0xff]
        %v377 = vld [vmem:[%s275 + $0x48] sm:$0xff]
        %v378 = vld [vmem:[%s275 + $0x50] sm:$0xff]
        %v379 = vld [vmem:[%s275 + $0x58] sm:$0xff]
        %v380 = vld [vmem:[%s275 + $0x60] sm:$0xff]
        %v381 = vld [vmem:[%s275 + $0x68] sm:$0xff]
        %v382 = vld [vmem:[%s275 + $0x70] sm:$0xff]
        %v383 = vld [vmem:[%s275 + $0x78] sm:$0xff]
        %v384 = vld [vmem:[%s275 + $0x80] sm:$0xff]
        %v385 = vld [vmem:[%s275 + $0x88] sm:$0xff]
        %v386 = vld [vmem:[%s275 + $0x90] sm:$0xff]
        %v387 = vld [vmem:[%s275 + $0x98] sm:$0xff]
        %v388 = vld [vmem:[%s275 + $0xa0] sm:$0xff]
        %v389 = vld [vmem:[%s275 + $0xa8] sm:$0xff]
        %v390 = vld [vmem:[%s275 + $0xb0] sm:$0xff]
        %v391 = vld [vmem:[%s275 + $0xb8] sm:$0xff]
        %v392 = vld [vmem:[%s275 + $0xc0] sm:$0xff]
        %v393 = vld [vmem:[%s275 + $0xc8] sm:$0xff]
        %v394 = vld [vmem:[%s275 + $0xd0] sm:$0xff]
        %v395 = vld [vmem:[%s275 + $0xd8] sm:$0xff]
        %v396 = vld [vmem:[%s275 + $0xe0] sm:$0xff]
        %v397 = vld [vmem:[%s275 + $0xe8] sm:$0xff]
        %v398 = vld [vmem:[%s275 + $0xf0] sm:$0xff]
        %v399 = vld [vmem:[%s275 + $0xf8] sm:$0xff]
        %v408 = vunpack.c.l.b16 %v360
        %v409 = vunpack.c.h.b16 %v360
        %v410 = vunpack.c.l.b16 %v361
        %v411 = vunpack.c.h.b16 %v361
        %v412 = vunpack.c.l.b16 %v362
        %v413 = vunpack.c.h.b16 %v362
        %v414 = vunpack.c.l.b16 %v363
        %v415 = vunpack.c.h.b16 %v363
        %v416 = vunpack.c.l.b16 %v364
        %v417 = vunpack.c.h.b16 %v364
        %v418 = vunpack.c.l.b16 %v365
        %v419 = vunpack.c.h.b16 %v365
        %v420 = vunpack.c.l.b16 %v366
        %v421 = vunpack.c.h.b16 %v366
        %v422 = vunpack.c.l.b16 %v367
        %v423 = vunpack.c.h.b16 %v367
        %v424 = vpack.c.b16 %v410, %v408
        %v425 = vpack.c.b16 %v411, %v409
        %v426 = vpack.c.b16 %v414, %v412
        %v427 = vpack.c.b16 %v415, %v413
        %v428 = vpack.c.b16 %v418, %v416
        %v429 = vpack.c.b16 %v419, %v417
        %v430 = vpack.c.b16 %v422, %v420
        %v431 = vpack.c.b16 %v423, %v421
        %v472 = vunpack.c.l.b16 %v368
        %v473 = vunpack.c.h.b16 %v368
        %v474 = vunpack.c.l.b16 %v369
        %v475 = vunpack.c.h.b16 %v369
        %v476 = vunpack.c.l.b16 %v370
        %v477 = vunpack.c.h.b16 %v370
        %v478 = vunpack.c.l.b16 %v371
        %v479 = vunpack.c.h.b16 %v371
        %v480 = vunpack.c.l.b16 %v372
        %v481 = vunpack.c.h.b16 %v372
        %v482 = vunpack.c.l.b16 %v373
        %v483 = vunpack.c.h.b16 %v373
        %v484 = vunpack.c.l.b16 %v374
        %v485 = vunpack.c.h.b16 %v374
        %v486 = vunpack.c.l.b16 %v375
        %v487 = vunpack.c.h.b16 %v375
        %v488 = vunpack.c.l.b16 %v376
        %v489 = vunpack.c.h.b16 %v376
        %v490 = vunpack.c.l.b16 %v377
        %v491 = vunpack.c.h.b16 %v377
        %v492 = vunpack.c.l.b16 %v378
        %v493 = vunpack.c.h.b16 %v378
        %v494 = vunpack.c.l.b16 %v379
        %v495 = vunpack.c.h.b16 %v379
        %v496 = vunpack.c.l.b16 %v380
        %v497 = vunpack.c.h.b16 %v380
        %v498 = vunpack.c.l.b16 %v381
        %v499 = vunpack.c.h.b16 %v381
        %v500 = vunpack.c.l.b16 %v382
        %v501 = vunpack.c.h.b16 %v382
        %v502 = vunpack.c.l.b16 %v383
        %v503 = vunpack.c.h.b16 %v383
        %v504 = vunpack.c.l.b16 %v384
        %v505 = vunpack.c.h.b16 %v384
        %v506 = vunpack.c.l.b16 %v385
        %v507 = vunpack.c.h.b16 %v385
        %v508 = vunpack.c.l.b16 %v386
        %v509 = vunpack.c.h.b16 %v386
        %v510 = vunpack.c.l.b16 %v387
        %v511 = vunpack.c.h.b16 %v387
        %v512 = vunpack.c.l.b16 %v388
        %v513 = vunpack.c.h.b16 %v388
        %v514 = vunpack.c.l.b16 %v389
        %v515 = vunpack.c.h.b16 %v389
        %v516 = vunpack.c.l.b16 %v390
        %v517 = vunpack.c.h.b16 %v390
        %v518 = vunpack.c.l.b16 %v391
        %v519 = vunpack.c.h.b16 %v391
        %v520 = vunpack.c.l.b16 %v392
        %v521 = vunpack.c.h.b16 %v392
        %v522 = vunpack.c.l.b16 %v393
        %v523 = vunpack.c.h.b16 %v393
        %v524 = vunpack.c.l.b16 %v394
        %v525 = vunpack.c.h.b16 %v394
        %v526 = vunpack.c.l.b16 %v395
        %v527 = vunpack.c.h.b16 %v395
        %v528 = vunpack.c.l.b16 %v396
        %v529 = vunpack.c.h.b16 %v396
        %v530 = vunpack.c.l.b16 %v397
        %v531 = vunpack.c.h.b16 %v397
        %v532 = vunpack.c.l.b16 %v398
        %v533 = vunpack.c.h.b16 %v398
        %v534 = vunpack.c.l.b16 %v399
        %v535 = vunpack.c.h.b16 %v399
        %v536 = vpack.c.b16 %v474, %v472
        %v537 = vpack.c.b16 %v475, %v473
        %v538 = vpack.c.b16 %v478, %v476
        %v539 = vpack.c.b16 %v479, %v477
        %v540 = vpack.c.b16 %v482, %v480
        %v541 = vpack.c.b16 %v483, %v481
        %v542 = vpack.c.b16 %v486, %v484
        %v543 = vpack.c.b16 %v487, %v485
        %v544 = vpack.c.b16 %v490, %v488
        %v545 = vpack.c.b16 %v491, %v489
        %v546 = vpack.c.b16 %v494, %v492
        %v547 = vpack.c.b16 %v495, %v493
        %v548 = vpack.c.b16 %v498, %v496
        %v549 = vpack.c.b16 %v499, %v497
        %v550 = vpack.c.b16 %v502, %v500
        %v551 = vpack.c.b16 %v503, %v501
        %v552 = vpack.c.b16 %v506, %v504
        %v553 = vpack.c.b16 %v507, %v505
        %v554 = vpack.c.b16 %v510, %v508
        %v555 = vpack.c.b16 %v511, %v509
        %v556 = vpack.c.b16 %v514, %v512
        %v557 = vpack.c.b16 %v515, %v513
        %v558 = vpack.c.b16 %v518, %v516
        %v559 = vpack.c.b16 %v519, %v517
        %v560 = vpack.c.b16 %v522, %v520
        %v561 = vpack.c.b16 %v523, %v521
        %v562 = vpack.c.b16 %v526, %v524
        %v563 = vpack.c.b16 %v527, %v525
        %v564 = vpack.c.b16 %v530, %v528
        %v565 = vpack.c.b16 %v531, %v529
        %v566 = vpack.c.b16 %v534, %v532
        %v567 = vpack.c.b16 %v535, %v533
        %600 = vmatprep.subr.bf16.mxu0 %v551
        %601 = vmatpush1.bf16.msra.mxu0 %v550
        %602 = vmatprep.subr.bf16.mxu0 %v549
        %603 = vmatpush1.bf16.msra.mxu0 %v548
        %604 = vmatprep.subr.bf16.mxu0 %v547
        %605 = vmatpush1.bf16.msra.mxu0 %v546
        %606 = vmatprep.subr.bf16.mxu0 %v545
        %607 = vmatpush1.bf16.msra.mxu0 %v544
        %608 = vmatprep.subr.bf16.mxu0 %v543
        %609 = vmatpush1.bf16.msra.mxu0 %v542
        %610 = vmatprep.subr.bf16.mxu0 %v541
        %611 = vmatpush1.bf16.msra.mxu0 %v540
        %612 = vmatprep.subr.bf16.mxu0 %v539
        %613 = vmatpush1.bf16.msra.mxu0 %v538
        %614 = vmatprep.subr.bf16.mxu0 %v537
        %615 = vmatpush1.bf16.msra.mxu0 %v536
        %616 = vmatprep.subr.bf16.mxu0 %v567
        %617 = vmatpush2.bf16.msra.mxu0 %v566
        %618 = vmatprep.subr.bf16.mxu0 %v565
        %619 = vmatpush2.bf16.msra.mxu0 %v564
        %620 = vmatprep.subr.bf16.mxu0 %v563
        %621 = vmatpush2.bf16.msra.mxu0 %v562
        %622 = vmatprep.subr.bf16.mxu0 %v561
        %623 = vmatpush2.bf16.msra.mxu0 %v560
        %624 = vmatprep.subr.bf16.mxu0 %v559
        %625 = vmatpush2.bf16.msra.mxu0 %v558
        %626 = vmatprep.subr.bf16.mxu0 %v557
        %627 = vmatpush2.bf16.msra.mxu0 %v556
        %628 = vmatprep.subr.bf16.mxu0 %v555
        %629 = vmatpush2.bf16.msra.mxu0 %v554
        %630 = vmatprep.subr.bf16.mxu0 %v553
        %631 = vmatpush2.bf16.msra.mxu0 %v552
        %632 = vmatprep.mubr.bf16.mxu0 %v425
        %633 = vmatmul.mubr.bf16.gmra.mxu0 %v424
        %v634 = vpop.f32.mrf.mxu0
        %v635 = vadd.f32 0.0, %v634
        %v636 = vpop.f32.mrf.mxu0
        %v637 = vadd.f32 0.0, %v636
        %v638 = vpop.f32.mrf.mxu0
        %v639 = vadd.f32 0.0, %v638
        %v640 = vpop.f32.mrf.mxu0
        %v641 = vadd.f32 0.0, %v640
        %642 = vmatprep.mubr.bf16.mxu0 %v427
        %643 = vmatmul.mubr.bf16.gmra.mxu0 %v426
        %v644 = vpop.f32.mrf.mxu0
        %v645 = vadd.f32 0.0, %v644
        %v646 = vpop.f32.mrf.mxu0
        %v647 = vadd.f32 0.0, %v646
        %v648 = vpop.f32.mrf.mxu0
        %v649 = vadd.f32 0.0, %v648
        %v650 = vpop.f32.mrf.mxu0
        %v651 = vadd.f32 0.0, %v650
        %652 = vmatprep.mubr.bf16.mxu0 %v429
        %653 = vmatmul.mubr.bf16.gmra.mxu0 %v428
        %v654 = vpop.f32.mrf.mxu0
        %v655 = vadd.f32 0.0, %v654
        %v656 = vpop.f32.mrf.mxu0
        %v657 = vadd.f32 0.0, %v656
        %v658 = vpop.f32.mrf.mxu0
        %v659 = vadd.f32 0.0, %v658
        %v660 = vpop.f32.mrf.mxu0
        %v661 = vadd.f32 0.0, %v660
        %662 = vmatprep.mubr.bf16.mxu0 %v431
        %663 = vmatmul.mubr.bf16.gmra.mxu0 %v430
        %v664 = vpop.f32.mrf.mxu0
        %v665 = vadd.f32 0.0, %v664
        %v666 = vpop.f32.mrf.mxu0
        %v667 = vadd.f32 0.0, %v666
        %v668 = vpop.f32.mrf.mxu0
        %v669 = vadd.f32 0.0, %v668
        %v670 = vpop.f32.mrf.mxu0
        %v671 = vadd.f32 0.0, %v670
        %672 = vdwg.mxu0
        %v673 = vadd.f32 %v344, %v635
        %v674 = vadd.f32 %v345, %v637
        %v675 = vadd.f32 %v346, %v639
        %v676 = vadd.f32 %v347, %v641
        %v677 = vadd.f32 %v348, %v645
        %v678 = vadd.f32 %v349, %v647
        %v679 = vadd.f32 %v350, %v649
        %v680 = vadd.f32 %v351, %v651
        %v681 = vadd.f32 %v352, %v655
        %v682 = vadd.f32 %v353, %v657
        %v683 = vadd.f32 %v354, %v659
        %v684 = vadd.f32 %v355, %v661
        %v685 = vadd.f32 %v356, %v665
        %v686 = vadd.f32 %v357, %v667
        %v687 = vadd.f32 %v358, %v669
        %v688 = vadd.f32 %v359, %v671
        %689 = vst [vmem:[#allocation2] sm:$0xff] %v673
        %690 = vst [vmem:[#allocation2 + $0x8] sm:$0xff] %v674
        %691 = vst [vmem:[#allocation2 + $0x10] sm:$0xff] %v675
        %692 = vst [vmem:[#allocation2 + $0x18] sm:$0xff] %v676
        %693 = vst [vmem:[#allocation2 + $0x20] sm:$0xff] %v677
        %694 = vst [vmem:[#allocation2 + $0x28] sm:$0xff] %v678
        %695 = vst [vmem:[#allocation2 + $0x30] sm:$0xff] %v679
        %696 = vst [vmem:[#allocation2 + $0x38] sm:$0xff] %v680
        %697 = vst [vmem:[#allocation2 + $0x40] sm:$0xff] %v681
        %698 = vst [vmem:[#allocation2 + $0x48] sm:$0xff] %v682
        %699 = vst [vmem:[#allocation2 + $0x50] sm:$0xff] %v683
        %700 = vst [vmem:[#allocation2 + $0x58] sm:$0xff] %v684
        %701 = vst [vmem:[#allocation2 + $0x60] sm:$0xff] %v685
        %702 = vst [vmem:[#allocation2 + $0x68] sm:$0xff] %v686
        %703 = vst [vmem:[#allocation2 + $0x70] sm:$0xff] %v687
        %704 = vst [vmem:[#allocation2 + $0x78] sm:$0xff] %v688
        %p705 = scmp.eq.s32.totalorder %s29, 1
        // Predicated region
        $region49: #{tpu_custom_call.1} parent=35 // pred_check
          %p706 = pneg %p705
        $region50: #{tpu_custom_call.1} parent=35 // pred_check_branch
          %708 = sbr.rel (%p706) target = $region52
        $region51: #{tpu_custom_call.1} parent=35 // pred_region
          %v709 = vld [vmem:[#allocation2] sm:$0xff]
          %v710 = vld [vmem:[#allocation2 + $0x8] sm:$0xff]
          %v711 = vld [vmem:[#allocation2 + $0x10] sm:$0xff]
          %v712 = vld [vmem:[#allocation2 + $0x18] sm:$0xff]
          %v713 = vld [vmem:[#allocation2 + $0x20] sm:$0xff]
          %v714 = vld [vmem:[#allocation2 + $0x28] sm:$0xff]
          %v715 = vld [vmem:[#allocation2 + $0x30] sm:$0xff]
          %v716 = vld [vmem:[#allocation2 + $0x38] sm:$0xff]
          %v717 = vld [vmem:[#allocation2 + $0x40] sm:$0xff]
          %v718 = vld [vmem:[#allocation2 + $0x48] sm:$0xff]
          %v719 = vld [vmem:[#allocation2 + $0x50] sm:$0xff]
          %v720 = vld [vmem:[#allocation2 + $0x58] sm:$0xff]
          %v721 = vld [vmem:[#allocation2 + $0x60] sm:$0xff]
          %v722 = vld [vmem:[#allocation2 + $0x68] sm:$0xff]
          %v723 = vld [vmem:[#allocation2 + $0x70] sm:$0xff]
          %v724 = vld [vmem:[#allocation2 + $0x78] sm:$0xff]
          %v725 = vld [vmem:[%s315] sm:$0x3]
          %v727 = vlaneseq
          %v728 = vshrl.u32 %v727, 7
          %v729 = vsub.s32 0, %v728
          %v730 = vrot.slane %v725, %v729
          %v731 = vlaneseq
          %v732 = vshrl.u32 %v731, 7
          %v733 = vsub.s32 1, %v732
          %v734 = vrot.slane %v725, %v733
          %v737 = vmul.f32 %v709, %v730
          %v738 = vmul.f32 %v710, %v734
          %v739 = vmul.f32 %v711, %v730
          %v740 = vmul.f32 %v712, %v734
          %v741 = vmul.f32 %v713, %v730
          %v742 = vmul.f32 %v714, %v734
          %v743 = vmul.f32 %v715, %v730
          %v744 = vmul.f32 %v716, %v734
          %v745 = vmul.f32 %v717, %v730
          %v746 = vmul.f32 %v718, %v734
          %v747 = vmul.f32 %v719, %v730
          %v748 = vmul.f32 %v720, %v734
          %v749 = vmul.f32 %v721, %v730
          %v750 = vmul.f32 %v722, %v734
          %v751 = vmul.f32 %v723, %v730
          %v752 = vmul.f32 %v724, %v734
          %v753 = vld [vmem:[%s320] sm:$0x3]
          %v755 = vlaneseq
          %v756 = vshrl.u32 %v755, 7
          %v757 = vsub.s32 0, %v756
          %v758 = vrot.slane %v753, %v757
          %v759 = vlaneseq
          %v760 = vshrl.u32 %v759, 7
          %v761 = vsub.s32 1, %v760
          %v762 = vrot.slane %v753, %v761
          %v765 = vadd.f32 %v737, %v758
          %v766 = vadd.f32 %v738, %v762
          %v767 = vadd.f32 %v739, %v758
          %v768 = vadd.f32 %v740, %v762
          %v769 = vadd.f32 %v741, %v758
          %v770 = vadd.f32 %v742, %v762
          %v771 = vadd.f32 %v743, %v758
          %v772 = vadd.f32 %v744, %v762
          %v773 = vadd.f32 %v745, %v758
          %v774 = vadd.f32 %v746, %v762
          %v775 = vadd.f32 %v747, %v758
          %v776 = vadd.f32 %v748, %v762
          %v777 = vadd.f32 %v749, %v758
          %v778 = vadd.f32 %v750, %v762
          %v779 = vadd.f32 %v751, %v758
          %v780 = vadd.f32 %v752, %v762
          %781 = vst [vmem:[#allocation8] sm:$0xff] %v765
          %782 = vst [vmem:[#allocation8 + $0x8] sm:$0xff] %v766
          %783 = vst [vmem:[#allocation8 + $0x10] sm:$0xff] %v767
          %784 = vst [vmem:[#allocation8 + $0x18] sm:$0xff] %v768
          %785 = vst [vmem:[#allocation8 + $0x20] sm:$0xff] %v769
          %786 = vst [vmem:[#allocation8 + $0x28] sm:$0xff] %v770
          %787 = vst [vmem:[#allocation8 + $0x30] sm:$0xff] %v771
          %788 = vst [vmem:[#allocation8 + $0x38] sm:$0xff] %v772
          %789 = vst [vmem:[#allocation8 + $0x40] sm:$0xff] %v773
          %790 = vst [vmem:[#allocation8 + $0x48] sm:$0xff] %v774
          %791 = vst [vmem:[#allocation8 + $0x50] sm:$0xff] %v775
          %792 = vst [vmem:[#allocation8 + $0x58] sm:$0xff] %v776
          %793 = vst [vmem:[#allocation8 + $0x60] sm:$0xff] %v777
          %794 = vst [vmem:[#allocation8 + $0x68] sm:$0xff] %v778
          %795 = vst [vmem:[#allocation8 + $0x70] sm:$0xff] %v779
          %796 = vst [vmem:[#allocation8 + $0x78] sm:$0xff] %v780
        $region52: #{tpu_custom_call.1} parent=35 // pred_fallthru
          _
        // Predicated region
        $region53: #{tpu_custom_call.1} parent=35 // pred_check
          %p797 = pneg %p169
        $region54: #{tpu_custom_call.1} parent=35 // pred_check_branch
          %799 = sbr.rel (%p797) target = $region56
        $region55: #{tpu_custom_call.1} parent=35 // pred_region
          %s800 = smul.u32 8, %s27
          %s801 = smul.u32 2, %s28
          %s803 = ssub.s32 2048, 2048
          %804 = vsyncadd [#allocation5], %s803
          %s805 = smul.addr %s800, 2
          %s806 = sadd.s32 %s801, %s805
          %s807 = smul.addr %s806, 128
          %s808 = scalar_lea.hbm %s4, %s807
          %s809 = sshll.u32 [#allocation8], 4
          %s810 = int_to_ptr.vmem [resolvable:$true] %s809
          %815 = dma.vmem_to_hbm [thread:$0]  %s810, 2048, %s808, [#allocation5], 256, 256, 16
        $region56: #{tpu_custom_call.1} parent=35 // pred_fallthru
          _
        // Predicated region
        $region57: #{tpu_custom_call.1} parent=35 // pred_check
          %p816 = pneg %p169
        $region58: #{tpu_custom_call.1} parent=35 // pred_check_branch
          %818 = sbr.rel (%p816) target = $region60
        $region59: #{tpu_custom_call.1} parent=35 // pred_region
          %819 = dma.done [#allocation5], 2048
        $region60: #{tpu_custom_call.1} parent=35 // pred_fallthru
          _
      $region36: #{tpu_custom_call.1} parent=5 // pred_fallthru
        _
      %p820 = scmp.le.s32.totalorder 2, %s17
      // Predicated region
      $region61: #{tpu_custom_call.1} parent=5 // pred_check
        %p821 = pneg %p820
      $region62: #{tpu_custom_call.1} parent=5 // pred_check_branch
        %823 = sbr.rel (%p821) target = $region64
      $region63: #{tpu_custom_call.1} parent=5 // pred_region
        %s824 = ssub.s32 %s17, 2
      $region64: #{tpu_custom_call.1} parent=5 // pred_fallthru
        _
    $region6: #{tpu_custom_call.1} parent=1 // loop_footer
      %s21 = sadd.s32 1, %s17
    $region7: #{tpu_custom_call.1} parent=1 // loop_footer_branch
      %16 = sbr.rel target = $region3
    $region8: #{tpu_custom_call.1} parent=1 // loop_exit
      _
    %825 = vsyncpa [#allocation4], 1
    %s826 = scalar_lea.sflag [#allocation4], 1
    %827 = vsyncpa %s826, 1
    %828 = vsyncpa [#allocation7], 1
    %s829 = scalar_lea.sflag [#allocation7], 1
    %830 = vsyncpa %s829, 1
    %831 = vsyncpa [#allocation5], 1
    %s832 = scalar_lea.sflag [#allocation5], 1
    %833 = vsyncpa %s832, 1

</llo_original>
